<compile_context>
chip_gen: v7x
topology: tpu7x:2x2x1
jax: 0.10.0
libtpu: 0.0.40
codegen_flags: <defaults>
</compile_context>

<pallas_src>
import jax
import jax.numpy as jnp
from jax.experimental import pallas as pl
from jax.experimental.pallas import tpu as pltpu


def _round_up(x, m):
    return ((x + m - 1) // m) * m


def head_kernel(x_ref, w1_ref, b1_ref, w2_ref, b2_ref, o_ref):
    # Linear 1: bf16 MXU matmul with f32 accumulation, bias + ReLU in f32.
    x = x_ref[...].astype(w1_ref.dtype)   # no-op cast if caller supplies bf16 x
    h = jnp.dot(x, w1_ref[...], preferred_element_type=jnp.float32)
    h = jnp.maximum(h + b1_ref[...], 0.0)
    # Linear 2: bf16 MXU matmul with f32 accumulation, bias in f32.
    y = jnp.dot(h.astype(w2_ref.dtype), w2_ref[...],
                preferred_element_type=jnp.float32)
    o_ref[...] = (y + b2_ref[...]).astype(o_ref.dtype)


def _vmem_estimate(block_b, in_dim, out_pad, x_isz, o_isz, w_isz, weight_bufs):
    """Rough per-kernel VMEM footprint in bytes (weight_bufs = 1 or 2)."""
    return (
        2 * block_b * in_dim * x_isz                                # x tiles (double-buffered)
        + 2 * block_b * out_pad * o_isz                             # out tiles (double-buffered)
        + block_b * (in_dim + out_pad) * 4                          # f32 intermediates (h, y)
        + weight_bufs * (in_dim * in_dim + in_dim * out_pad) * w_isz  # weights
        + weight_bufs * (in_dim + out_pad) * 4                      # biases (f32)
    )


def _vmem_cap_bytes():
    """Generation-aware VMEM ceiling with headroom (v7x 64MiB vs v5e/v6e 128MiB)."""
    try:
        cap = pltpu.get_tpu_info().vmem_capacity_bytes
    except Exception:
        cap = 64 << 20  # conservative default that is safe on every generation
    return max(32 << 20, cap - (8 << 20))


def _build_head_call(B, in_dim, out_pad, block_b, out_dtype,
                     vmem_limit_bytes, single_buffer_weights):
    # Weights / biases have constant index_maps (resident across all grid steps);
    # a single VMEM buffer is enough for them.
    const_kwargs = dict(pipeline_mode=pl.Buffered(1)) if single_buffer_weights else {}

    grid = (pl.cdiv(B, block_b),)
    return pl.pallas_call(
        head_kernel,
        out_shape=jax.ShapeDtypeStruct((B, out_pad), out_dtype),
        grid_spec=pltpu.PrefetchScalarGridSpec(
            num_scalar_prefetch=0,
            grid=grid,
            in_specs=[
                pl.BlockSpec((block_b, in_dim), lambda i: (i, 0)),                  # x tile
                pl.BlockSpec((in_dim, in_dim), lambda i: (0, 0), **const_kwargs),   # W1^T
                pl.BlockSpec((1, in_dim), lambda i: (0, 0), **const_kwargs),        # b1
                pl.BlockSpec((in_dim, out_pad), lambda i: (0, 0), **const_kwargs),  # W2^T (lane-padded)
                pl.BlockSpec((1, out_pad), lambda i: (0, 0), **const_kwargs),       # b2 (lane-padded)
            ],
            out_specs=pl.BlockSpec((block_b, out_pad), lambda i: (i, 0)),
        ),
        compiler_params=pltpu.CompilerParams(
            # On v7x, pltpu.CORE_PARALLEL on this batch axis would shard across
            # both TensorCores; kept "parallel" for portability across builds.
            dimension_semantics=("parallel",),
            vmem_limit_bytes=vmem_limit_bytes,
        ),
    )


def head_forward(x, w1, b1, w2, b2, *, block_b=None, matmul_dtype=jnp.bfloat16,
                 out_dtype=None):
    """Forward pass of Head.

    x:  (B, in_dim)          (pass bf16 to halve the dominant input HBM stream)
    w1: (in_dim, in_dim)     PyTorch layout (out_features, in_features)
    b1: (in_dim,)
    w2: (out_dim, in_dim)    PyTorch layout
    b2: (out_dim,)
    Returns (B, out_dim) in out_dtype (default: x.dtype).
    """
    B, in_dim = x.shape
    out_dim = w2.shape[0]
    out_dtype = x.dtype if out_dtype is None else out_dtype

    # ---- lane-dense output: pad out_dim to a multiple of 128 ----
    out_pad = _round_up(max(out_dim, 128), 128)

    x_isz = jnp.dtype(x.dtype).itemsize
    o_isz = jnp.dtype(out_dtype).itemsize
    w_isz = jnp.dtype(matmul_dtype).itemsize
    vmem_cap = _vmem_cap_bytes()

    # ---- batch tile sizing: big tiles (multiple of 8); shrink to fit VMEM ----
    if block_b is None:
        block_b = min(1024, _round_up(B, 8))
    block_b = max(8, _round_up(block_b, 8))
    while block_b > 8 and (
            2 * _vmem_estimate(block_b, in_dim, out_pad, x_isz, o_isz, w_isz, 1)
            + (8 << 20)) > vmem_cap:
        block_b = max(8, _round_up(block_b // 2, 8))
    # TODO(synk): very large in_dim (resident bf16 weights alone near the v7x
    # 64 MiB cap) needs a K-tiled second grid axis with an f32 accumulator.

    # ---- pack operands: pre-transpose + pre-cast weights to the MXU dtype ----
    w1_t = w1.T.astype(matmul_dtype)                                   # (in_dim, in_dim)
    w2_t = jnp.zeros((in_dim, out_pad), matmul_dtype).at[:, :out_dim].set(
        w2.T.astype(matmul_dtype))
    b1_2d = b1.reshape(1, in_dim).astype(jnp.float32)
    b2_2d = jnp.zeros((1, out_pad), jnp.float32).at[:, :out_dim].set(
        b2.astype(jnp.float32))

    def _vmem_limit(weight_bufs):
        est = _vmem_estimate(block_b, in_dim, out_pad, x_isz, o_isz, w_isz,
                             weight_bufs)
        return min(max(2 * est + (8 << 20), 32 << 20), vmem_cap)

    call_args = (x, w1_t, b1_2d, w2_t, b2_2d)
    try:
        y_pad = _build_head_call(B, in_dim, out_pad, block_b, out_dtype,
                                 _vmem_limit(1), True)(*call_args)
    except Exception:
        # Fallback if single-buffering via pipeline_mode is rejected by this
        # JAX build; weights are then double-buffered, so size VMEM for 2 copies.
        y_pad = _build_head_call(B, in_dim, out_pad, block_b, out_dtype,
                                 _vmem_limit(2), False)(*call_args)

    return y_pad[:, :out_dim] if out_pad != out_dim else y_pad


def init_head_params(key, in_dim, out_dim, dtype=jnp.float32):
    """Mimics nn.Linear's U(-1/sqrt(fan_in), 1/sqrt(fan_in)) init, PyTorch layouts."""
    k1, k2, k3, k4 = jax.random.split(key, 4)
    bound = 1.0 / (in_dim ** 0.5)
    w1 = jax.random.uniform(k1, (in_dim, in_dim), dtype, -bound, bound)
    b1 = jax.random.uniform(k2, (in_dim,), dtype, -bound, bound)
    w2 = jax.random.uniform(k3, (out_dim, in_dim), dtype, -bound, bound)
    b2 = jax.random.uniform(k4, (out_dim,), dtype, -bound, bound)
    return w1, b1, w2, b2


def reference_forward(x, w1, b1, w2, b2, matmul_dtype=jnp.float32):
    """Pure-JAX reference. With matmul_dtype=bf16 it emulates the kernel's
    bf16-MXU / f32-accumulate math; with f32 it matches the PyTorch module."""
    xm = x.astype(matmul_dtype)
    h = jnp.dot(xm, w1.T.astype(matmul_dtype), preferred_element_type=jnp.float32)
    h = jnp.maximum(h + b1.astype(jnp.float32), 0.0)
    y = jnp.dot(h.astype(matmul_dtype), w2.T.astype(matmul_dtype),
                preferred_element_type=jnp.float32)
    return y + b2.astype(jnp.float32)


if __name__ == "__main__":
    key = jax.random.PRNGKey(0)
    k_params, k_x, k_x2 = jax.random.split(key, 3)

    # Small shapes consistent with the module.
    B, in_dim, out_dim = 8, 32, 16
    w1, b1, w2, b2 = init_head_params(k_params, in_dim, out_dim)
    x = jax.random.normal(k_x, (B, in_dim), jnp.float32)

    y = jax.block_until_ready(head_forward(x, w1, b1, w2, b2))
    assert y.shape == (B, out_dim)

    y_bf16_ref = reference_forward(x, w1, b1, w2, b2, matmul_dtype=jnp.bfloat16)
    y_f32_ref = reference_forward(x, w1, b1, w2, b2, matmul_dtype=jnp.float32)
    assert jnp.allclose(y, y_bf16_ref, atol=1e-3, rtol=1e-3), "mismatch vs bf16 reference"
    assert jnp.allclose(y, y_f32_ref, atol=1e-1, rtol=1e-1), "mismatch vs f32 reference"

    # Larger case exercising the multi-step batch grid with a ragged last block
    # (no wrapper-side padding of x) and output lane padding.
    B2, in_dim2, out_dim2 = 200, 128, 16
    w1b, b1b, w2b, b2b = init_head_params(k_params, in_dim2, out_dim2)
    x2 = jax.random.normal(k_x2, (B2, in_dim2), jnp.float32)
    y2 = jax.block_until_ready(head_forward(x2, w1b, b1b, w2b, b2b, block_b=64))
    y2_ref = reference_forward(x2, w1b, b1b, w2b, b2b, matmul_dtype=jnp.bfloat16)
    assert y2.shape == (B2, out_dim2)
    assert jnp.allclose(y2, y2_ref, atol=1e-3, rtol=1e-3), "mismatch (ragged tiled case)"

    print("KERNEL_OK")
</pallas_src>

<mosaic_0001>
module attributes {stable_mosaic.version = 11 : i64} {
  func.func @head_kernel(%arg0: i32, %arg1: memref<8x32xf32, #tpu.memory_space<vmem>>, %arg2: memref<32x32xbf16, #tpu.memory_space<vmem>>, %arg3: memref<1x32xf32, #tpu.memory_space<vmem>>, %arg4: memref<32x128xbf16, #tpu.memory_space<vmem>>, %arg5: memref<1x128xf32, #tpu.memory_space<vmem>>, %arg6: memref<8x128xf32, #tpu.memory_space<vmem>>) attributes {dimension_semantics = [#tpu.dimension_semantics<parallel>], iteration_bounds = array<i64: 1>, scalar_prefetch = 0 : i64, scratch_operands = 0 : i64, tpu.core_type = #tpu.core_type<tc>, window_params = [{transform_indices = @transform_0, window_bounds = array<i64: 8, 32>}, {pipeline_mode = #tpu.pipeline_mode<synchronous>, transform_indices = @transform_1, window_bounds = array<i64: 32, 32>}, {pipeline_mode = #tpu.pipeline_mode<synchronous>, transform_indices = @transform_2, window_bounds = array<i64: 1, 32>}, {pipeline_mode = #tpu.pipeline_mode<synchronous>, transform_indices = @transform_3, window_bounds = array<i64: 32, 128>}, {pipeline_mode = #tpu.pipeline_mode<synchronous>, transform_indices = @transform_4, window_bounds = array<i64: 1, 128>}, {transform_indices = @transform_5, window_bounds = array<i64: 8, 128>}]} {
    %c0 = arith.constant 0 : index
    %c0_0 = arith.constant 0 : index
    %0 = vector.load %arg1[%c0, %c0_0] : memref<8x32xf32, #tpu.memory_space<vmem>>, vector<8x32xf32>
    %1 = arith.truncf %0 : vector<8x32xf32> to vector<8x32xbf16>
    %c0_1 = arith.constant 0 : index
    %c0_2 = arith.constant 0 : index
    %2 = vector.load %arg2[%c0_1, %c0_2] : memref<32x32xbf16, #tpu.memory_space<vmem>>, vector<32x32xbf16>
    %cst = arith.constant dense<0.000000e+00> : vector<8x32xf32>
    %3 = tpu.matmul %1, %2, %cst {dimension_numbers = #tpu.dot_dimension_numbers<[1], [0], [0], [1], [0, 0, 1, 1], [], []>} : vector<8x32xbf16>, vector<32x32xbf16>, vector<8x32xf32> -> vector<8x32xf32>
    %c0_3 = arith.constant 0 : index
    %c0_4 = arith.constant 0 : index
    %4 = vector.load %arg3[%c0_3, %c0_4] : memref<1x32xf32, #tpu.memory_space<vmem>>, vector<1x32xf32>
    %5 = vector.broadcast %4 : vector<1x32xf32> to vector<8x32xf32>
    %6 = arith.addf %3, %5 : vector<8x32xf32>
    %cst_5 = arith.constant 0.000000e+00 : f32
    %7 = vector.broadcast %cst_5 : f32 to vector<8x32xf32>
    %8 = arith.maximumf %6, %7 : vector<8x32xf32>
    %9 = arith.truncf %8 : vector<8x32xf32> to vector<8x32xbf16>
    %c0_6 = arith.constant 0 : index
    %c0_7 = arith.constant 0 : index
    %10 = vector.load %arg4[%c0_6, %c0_7] : memref<32x128xbf16, #tpu.memory_space<vmem>>, vector<32x128xbf16>
    %cst_8 = arith.constant dense<0.000000e+00> : vector<8x128xf32>
    %11 = tpu.matmul %9, %10, %cst_8 {dimension_numbers = #tpu.dot_dimension_numbers<[1], [0], [0], [1], [0, 0, 1, 1], [], []>} : vector<8x32xbf16>, vector<32x128xbf16>, vector<8x128xf32> -> vector<8x128xf32>
    %c0_9 = arith.constant 0 : index
    %c0_10 = arith.constant 0 : index
    %12 = vector.load %arg5[%c0_9, %c0_10] : memref<1x128xf32, #tpu.memory_space<vmem>>, vector<1x128xf32>
    %13 = vector.broadcast %12 : vector<1x128xf32> to vector<8x128xf32>
    %14 = arith.addf %11, %13 : vector<8x128xf32>
    %c0_11 = arith.constant 0 : index
    %c0_12 = arith.constant 0 : index
    %15 = vector.load %arg6[%c0_11, %c0_12] : memref<8x128xf32, #tpu.memory_space<vmem>>, vector<8x128xf32>
    tpu.vector_store %arg6[%c0_11, %c0_12], %14 {strides = array<i32>} : memref<8x128xf32, #tpu.memory_space<vmem>>, vector<8x128xf32>,
    return
  }
  func.func @transform_0(%arg0: i32) -> (i32, i32) {
    %c0_i32 = arith.constant 0 : i32
    %c0_i32_0 = arith.constant 0 : i32
    return %arg0, %c0_i32 : i32, i32
  }
  func.func @transform_1(%arg0: i32) -> (i32, i32) {
    %c0_i32 = arith.constant 0 : i32
    %c0_i32_0 = arith.constant 0 : i32
    %c0_i32_1 = arith.constant 0 : i32
    return %c0_i32, %c0_i32_0 : i32, i32
  }
  func.func @transform_2(%arg0: i32) -> (i32, i32) {
    %c0_i32 = arith.constant 0 : i32
    %c0_i32_0 = arith.constant 0 : i32
    %c0_i32_1 = arith.constant 0 : i32
    return %c0_i32, %c0_i32_0 : i32, i32
  }
  func.func @transform_3(%arg0: i32) -> (i32, i32) {
    %c0_i32 = arith.constant 0 : i32
    %c0_i32_0 = arith.constant 0 : i32
    %c0_i32_1 = arith.constant 0 : i32
    return %c0_i32, %c0_i32_0 : i32, i32
  }
  func.func @transform_4(%arg0: i32) -> (i32, i32) {
    %c0_i32 = arith.constant 0 : i32
    %c0_i32_0 = arith.constant 0 : i32
    %c0_i32_1 = arith.constant 0 : i32
    return %c0_i32, %c0_i32_0 : i32, i32
  }
  func.func @transform_5(%arg0: i32) -> (i32, i32) {
    %c0_i32 = arith.constant 0 : i32
    %c0_i32_0 = arith.constant 0 : i32
    return %arg0, %c0_i32 : i32, i32
  }
}

module attributes {stable_mosaic.version = 11 : i64} {
  func.func @head_kernel(%arg0: i32, %arg1: memref<8x32xf32, #tpu.memory_space<vmem>>, %arg2: memref<32x32xbf16, #tpu.memory_space<vmem>>, %arg3: memref<1x32xf32, #tpu.memory_space<vmem>>, %arg4: memref<32x128xbf16, #tpu.memory_space<vmem>>, %arg5: memref<1x128xf32, #tpu.memory_space<vmem>>, %arg6: memref<8x128xf32, #tpu.memory_space<vmem>>) attributes {dimension_semantics = [#tpu.dimension_semantics<parallel>], iteration_bounds = array<i64: 1>, scalar_prefetch = 0 : i64, scratch_operands = 0 : i64, tpu.core_type = #tpu.core_type<tc>, window_params = [{transform_indices = @transform_0, window_bounds = array<i64: 8, 32>}, {pipeline_mode = #tpu.pipeline_mode<synchronous>, transform_indices = @transform_1, window_bounds = array<i64: 32, 32>}, {pipeline_mode = #tpu.pipeline_mode<synchronous>, transform_indices = @transform_2, window_bounds = array<i64: 1, 32>}, {pipeline_mode = #tpu.pipeline_mode<synchronous>, transform_indices = @transform_3, window_bounds = array<i64: 32, 128>}, {pipeline_mode = #tpu.pipeline_mode<synchronous>, transform_indices = @transform_4, window_bounds = array<i64: 1, 128>}, {transform_indices = @transform_5, window_bounds = array<i64: 8, 128>}]} {
    %c0 = arith.constant 0 : index
    %c0_0 = arith.constant 0 : index
    %0 = vector.load %arg1[%c0, %c0_0] : memref<8x32xf32, #tpu.memory_space<vmem>>, vector<8x32xf32>
    %1 = arith.truncf %0 : vector<8x32xf32> to vector<8x32xbf16>
    %c0_1 = arith.constant 0 : index
    %c0_2 = arith.constant 0 : index
    %2 = vector.load %arg2[%c0_1, %c0_2] : memref<32x32xbf16, #tpu.memory_space<vmem>>, vector<32x32xbf16>
    %cst = arith.constant dense<0.000000e+00> : vector<8x32xf32>
    %3 = tpu.matmul %1, %2, %cst {dimension_numbers = #tpu.dot_dimension_numbers<[1], [0], [0], [1], [0, 0, 1, 1], [], []>} : vector<8x32xbf16>, vector<32x32xbf16>, vector<8x32xf32> -> vector<8x32xf32>
    %c0_3 = arith.constant 0 : index
    %c0_4 = arith.constant 0 : index
    %4 = vector.load %arg3[%c0_3, %c0_4] : memref<1x32xf32, #tpu.memory_space<vmem>>, vector<1x32xf32>
    %5 = vector.broadcast %4 : vector<1x32xf32> to vector<8x32xf32>
    %6 = arith.addf %3, %5 : vector<8x32xf32>
    %cst_5 = arith.constant 0.000000e+00 : f32
    %7 = vector.broadcast %cst_5 : f32 to vector<8x32xf32>
    %8 = arith.maximumf %6, %7 : vector<8x32xf32>
    %9 = arith.truncf %8 : vector<8x32xf32> to vector<8x32xbf16>
    %c0_6 = arith.constant 0 : index
    %c0_7 = arith.constant 0 : index
    %10 = vector.load %arg4[%c0_6, %c0_7] : memref<32x128xbf16, #tpu.memory_space<vmem>>, vector<32x128xbf16>
    %cst_8 = arith.constant dense<0.000000e+00> : vector<8x128xf32>
    %11 = tpu.matmul %9, %10, %cst_8 {dimension_numbers = #tpu.dot_dimension_numbers<[1], [0], [0], [1], [0, 0, 1, 1], [], []>} : vector<8x32xbf16>, vector<32x128xbf16>, vector<8x128xf32> -> vector<8x128xf32>
    %c0_9 = arith.constant 0 : index
    %c0_10 = arith.constant 0 : index
    %12 = vector.load %arg5[%c0_9, %c0_10] : memref<1x128xf32, #tpu.memory_space<vmem>>, vector<1x128xf32>
    %13 = vector.broadcast %12 : vector<1x128xf32> to vector<8x128xf32>
    %14 = arith.addf %11, %13 : vector<8x128xf32>
    %c0_11 = arith.constant 0 : index
    %c0_12 = arith.constant 0 : index
    %15 = vector.load %arg6[%c0_11, %c0_12] : memref<8x128xf32, #tpu.memory_space<vmem>>, vector<8x128xf32>
    tpu.vector_store %arg6[%c0_11, %c0_12], %14 {strides = array<i32>} : memref<8x128xf32, #tpu.memory_space<vmem>>, vector<8x128xf32>,
    return
  }
  func.func @transform_0(%arg0: i32) -> (i32, i32) {
    %c0_i32 = arith.constant 0 : i32
    %c0_i32_0 = arith.constant 0 : i32
    return %arg0, %c0_i32 : i32, i32
  }
  func.func @transform_1(%arg0: i32) -> (i32, i32) {
    %c0_i32 = arith.constant 0 : i32
    %c0_i32_0 = arith.constant 0 : i32
    %c0_i32_1 = arith.constant 0 : i32
    return %c0_i32, %c0_i32_0 : i32, i32
  }
  func.func @transform_2(%arg0: i32) -> (i32, i32) {
    %c0_i32 = arith.constant 0 : i32
    %c0_i32_0 = arith.constant 0 : i32
    %c0_i32_1 = arith.constant 0 : i32
    return %c0_i32, %c0_i32_0 : i32, i32
  }
  func.func @transform_3(%arg0: i32) -> (i32, i32) {
    %c0_i32 = arith.constant 0 : i32
    %c0_i32_0 = arith.constant 0 : i32
    %c0_i32_1 = arith.constant 0 : i32
    return %c0_i32, %c0_i32_0 : i32, i32
  }
  func.func @transform_4(%arg0: i32) -> (i32, i32) {
    %c0_i32 = arith.constant 0 : i32
    %c0_i32_0 = arith.constant 0 : i32
    %c0_i32_1 = arith.constant 0 : i32
    return %c0_i32, %c0_i32_0 : i32, i32
  }
  func.func @transform_5(%arg0: i32) -> (i32, i32) {
    %c0_i32 = arith.constant 0 : i32
    %c0_i32_0 = arith.constant 0 : i32
    return %arg0, %c0_i32 : i32, i32
  }
}

</mosaic_0001>

<llo_original>
// kernel: tpu_custom_call.1
$region0: #{tpu_custom_call.1}
  #allocation0 [shape = 'u32[]', space=smem, size = 0x4, offset = 0x4, fixed_abs, tag = 'smem constant byte address 0x4 - core index']
  #allocation1 [shape = 'u32[144,128]{1,0:T(1,128)}', space=vmem, size = 0x12000, scoped, tag = 'internal scratch']
  %s0 = inlined_call_operand.hbm [shape: f32[8,32], index: 0, kind: input, shape index: {}]
  %s1 = inlined_call_operand.hbm [shape: bf16[32,32], index: 1, kind: input, shape index: {}]
  %s2 = inlined_call_operand.vmem [shape: f32[1,32], index: 2, kind: input, shape index: {}]
  %s3 = inlined_call_operand.hbm [shape: bf16[32,128], index: 3, kind: input, shape index: {}]
  %s4 = inlined_call_operand.vmem [shape: f32[1,128], index: 4, kind: input, shape index: {}]
  %s5 = inlined_call_operand.hbm [shape: f32[8,128], index: 5, kind: output, shape index: {}]
  %s6 = sld [smem:[#allocation0]]
  $region42: #{tpu_custom_call.1} parent=0
    _
  %s8 = ssub.s32 1, %s6
  %s9 = scalar_select 0, %s8, %s6
  $region1: #{tpu_custom_call.1} parent=0
    #allocation2 [shape = 'u8[4096]{0}', space=vmem, size = 0x1000, scoped, tag = 'input window, operand 0, single buffered']
    #allocation3 [shape = 's32[1]{0}', space=sflag, size = 0x4, scoped, tag = 'scoped memory for tpu_custom_call.1']
    #allocation4 [shape = 's32[1]{0}', space=sflag, size = 0x4, scoped, tag = 'scoped memory for tpu_custom_call.1']
    #allocation5 [shape = 'u8[8192]{0}', space=vmem, size = 0x2000, scoped, tag = 'input window, operand 1, single buffered']
    #allocation6 [shape = 's32[1]{0}', space=sflag, size = 0x4, scoped, tag = 'scoped memory for tpu_custom_call.1']
    #allocation7 [shape = 'u8[8192]{0}', space=vmem, size = 0x2000, scoped, tag = 'input window, operand 3, single buffered']
    #allocation8 [shape = 'u8[4096]{0}', space=vmem, size = 0x1000, scoped, tag = 'output window, operand 0, single buffered']
    %10 = vsyncpa [#allocation3], 0
    %11 = vsyncpa [#allocation6], 0
    %12 = vsyncpa [#allocation4], 0
    // Predicated region
    $region2: #{tpu_custom_call.1} parent=1 // pred_check
      _
    $region3: #{tpu_custom_call.1} parent=1 // pred_check_branch
      %14 = sbr.rel (0) target = $region5
    $region4: #{tpu_custom_call.1} parent=1 // pred_region
      %s16 = ssub.s32 128, 128
      %17 = vsyncadd [#allocation3], %s16
      %s19 = sshll.u32 [#allocation2], 4
      %s20 = int_to_ptr.vmem [resolvable:$true] %s19
      %22 = dma.hbm_to_vmem [thread:$0]  %s0, 128, %s20, [#allocation3]
    $region5: #{tpu_custom_call.1} parent=1 // pred_fallthru
      _
    // Predicated region
    $region6: #{tpu_custom_call.1} parent=1 // pred_check
      _
    $region7: #{tpu_custom_call.1} parent=1 // pred_check_branch
      %24 = sbr.rel (0) target = $region9
    $region8: #{tpu_custom_call.1} parent=1 // pred_region
      %s26 = ssub.s32 256, 256
      %27 = vsyncadd [#allocation6], %s26
      %s28 = sshll.u32 [#allocation5], 4
      %s29 = int_to_ptr.vmem [resolvable:$true] %s28
      %34 = dma.hbm_to_vmem [thread:$0]  %s1, 256, %s29, [#allocation6], 64, 64, 4
    $region9: #{tpu_custom_call.1} parent=1 // pred_fallthru
      _
    // Predicated region
    $region10: #{tpu_custom_call.1} parent=1 // pred_check
      _
    $region11: #{tpu_custom_call.1} parent=1 // pred_check_branch
      %36 = sbr.rel (0) target = $region13
    $region12: #{tpu_custom_call.1} parent=1 // pred_region
      _
    $region13: #{tpu_custom_call.1} parent=1 // pred_fallthru
      _
    // Predicated region
    $region14: #{tpu_custom_call.1} parent=1 // pred_check
      _
    $region15: #{tpu_custom_call.1} parent=1 // pred_check_branch
      %38 = sbr.rel (0) target = $region17
    $region16: #{tpu_custom_call.1} parent=1 // pred_region
      %s40 = ssub.s32 256, 256
      %41 = vsyncadd [#allocation6], %s40
      %s42 = sshll.u32 [#allocation7], 4
      %s43 = int_to_ptr.vmem [resolvable:$true] %s42
      %48 = dma.hbm_to_vmem [thread:$0]  %s3, 256, %s43, [#allocation6], 64, 64, 4
    $region17: #{tpu_custom_call.1} parent=1 // pred_fallthru
      _
    // Predicated region
    $region18: #{tpu_custom_call.1} parent=1 // pred_check
      _
    $region19: #{tpu_custom_call.1} parent=1 // pred_check_branch
      %50 = sbr.rel (0) target = $region21
    $region20: #{tpu_custom_call.1} parent=1 // pred_region
      _
    $region21: #{tpu_custom_call.1} parent=1 // pred_fallthru
      _
    // Predicated region
    $region22: #{tpu_custom_call.1} parent=1 // pred_check
      _
    $region23: #{tpu_custom_call.1} parent=1 // pred_check_branch
      %52 = sbr.rel (0) target = $region25
    $region24: #{tpu_custom_call.1} parent=1 // pred_region
      %53 = dma.done [#allocation3], 128
    $region25: #{tpu_custom_call.1} parent=1 // pred_fallthru
      _
    // Predicated region
    $region26: #{tpu_custom_call.1} parent=1 // pred_check
      _
    $region27: #{tpu_custom_call.1} parent=1 // pred_check_branch
      %55 = sbr.rel (0) target = $region29
    $region28: #{tpu_custom_call.1} parent=1 // pred_region
      %56 = dma.done [#allocation6], 256
    $region29: #{tpu_custom_call.1} parent=1 // pred_fallthru
      _
    // Predicated region
    $region30: #{tpu_custom_call.1} parent=1 // pred_check
      _
    $region31: #{tpu_custom_call.1} parent=1 // pred_check_branch
      %58 = sbr.rel (0) target = $region33
    $region32: #{tpu_custom_call.1} parent=1 // pred_region
      %59 = dma.done [#allocation6], 256
    $region33: #{tpu_custom_call.1} parent=1 // pred_fallthru
      _
    %v61 = vld [vmem:[#allocation2] sm:$0xff]
    %v62 = vpack.c.bf16 %v61, %v61
    %v63 = vld [vmem:[#allocation5] sm:$0xf]
    %v64 = vld [vmem:[#allocation5 + $0x4] sm:$0xf]
    %v65 = vld [vmem:[#allocation5 + $0x8] sm:$0xf]
    %v66 = vld [vmem:[#allocation5 + $0xc] sm:$0xf]
    %v67 = vld [vmem:[%s2] sm:$0x1]
    %v69 = vlaneseq
    %v70 = vshrl.u32 %v69, 7
    %v71 = vsub.s32 0, %v70
    %v72 = vrot.slane %v67, %v71
    %v78 = vunpack.c.l.b16 %v63
    %v79 = vunpack.c.l.b16 %v64
    %v80 = vunpack.c.l.b16 %v65
    %v81 = vunpack.c.l.b16 %v66
    %v82 = vpack.c.b16 %v79, %v78
    %v83 = vpack.c.b16 %v81, %v80
    %vm86 = vcmask 261120
    %v88 = vsel %vm86, %v62, 0
    %90 = vmatprep.subr.bf16.mxu0 0
    %91 = vmatpush1.bf16.msra.mxu0 %v82
    %92 = vmatprep.subr.bf16.mxu0 0
    %93 = vmatpush1.bf16.msra.mxu0 %v83
    %94 = vmatprep.subr.bf16.mxu0 0
    %95 = vmatpush1.bf16.msra.mxu0 0
    %96 = vmatprep.subr.bf16.mxu0 0
    %97 = vmatpush1.bf16.msra.mxu0 0
    %98 = vmatprep.subr.bf16.mxu0 0
    %99 = vmatpush1.bf16.msra.mxu0 0
    %100 = vmatprep.subr.bf16.mxu0 0
    %101 = vmatpush1.bf16.msra.mxu0 0
    %102 = vmatprep.subr.bf16.mxu0 0
    %103 = vmatpush1.bf16.msra.mxu0 0
    %104 = vmatprep.subr.bf16.mxu0 0
    %105 = vmatpush1.bf16.msra.mxu0 0
    %106 = vmatprep.subr.bf16.mxu0 0
    %107 = vmatpush1.bf16.msra.mxu0 0
    %108 = vmatprep.subr.bf16.mxu0 0
    %109 = vmatpush1.bf16.msra.mxu0 0
    %110 = vmatprep.subr.bf16.mxu0 0
    %111 = vmatpush1.bf16.msra.mxu0 0
    %112 = vmatprep.subr.bf16.mxu0 0
    %113 = vmatpush1.bf16.msra.mxu0 0
    %114 = vmatprep.subr.bf16.mxu0 0
    %115 = vmatpush1.bf16.msra.mxu0 0
    %116 = vmatprep.subr.bf16.mxu0 0
    %117 = vmatpush1.bf16.msra.mxu0 0
    %118 = vmatprep.subr.bf16.mxu0 0
    %119 = vmatpush1.bf16.msra.mxu0 0
    %120 = vmatprep.subr.bf16.mxu0 0
    %121 = vmatpush1.bf16.msra.mxu0 0
    %122 = vmatprep.mubr.bf16.mxu0 0
    %123 = vmatmul.mubr.bf16.gmra.mrb[0].mxu0 %v88
    %v124 = vpop.f32.mrb[0].mxu0
    %v125 = vadd.f32 %v72, %v124
    %v126 = vpop.f32.mrb[0].mxu0
    %v127 = vpop.f32.mrb[0].mxu0
    %v128 = vpop.f32.mrb[0].mxu0
    %129 = vdwg.mxu0
    %v130 = vmax.f32 %v125, 0.0
    %v131 = vpack.c.bf16 %v130, %v130
    %v132 = vld [vmem:[#allocation7] sm:$0xf]
    %v133 = vld [vmem:[#allocation7 + $0x4] sm:$0xf]
    %v134 = vld [vmem:[#allocation7 + $0x8] sm:$0xf]
    %v135 = vld [vmem:[#allocation7 + $0xc] sm:$0xf]
    %v136 = vld [vmem:[%s4] sm:$0x1]
    %v138 = vlaneseq
    %v139 = vshrl.u32 %v138, 7
    %v140 = vsub.s32 0, %v139
    %v141 = vrot.slane %v136, %v140
    %v147 = vunpack.c.l.b16 %v132
    %v148 = vunpack.c.l.b16 %v133
    %v149 = vunpack.c.l.b16 %v134
    %v150 = vunpack.c.l.b16 %v135
    %v151 = vpack.c.b16 %v148, %v147
    %v152 = vpack.c.b16 %v150, %v149
    %v156 = vsel %vm86, %v131, 0
    %158 = vmatprep.subr.bf16.mxu0 0
    %159 = vmatpush1.bf16.msra.mxu0 %v151
    %160 = vmatprep.subr.bf16.mxu0 0
    %161 = vmatpush1.bf16.msra.mxu0 %v152
    %162 = vmatprep.subr.bf16.mxu0 0
    %163 = vmatpush1.bf16.msra.mxu0 0
    %164 = vmatprep.subr.bf16.mxu0 0
    %165 = vmatpush1.bf16.msra.mxu0 0
    %166 = vmatprep.subr.bf16.mxu0 0
    %167 = vmatpush1.bf16.msra.mxu0 0
    %168 = vmatprep.subr.bf16.mxu0 0
    %169 = vmatpush1.bf16.msra.mxu0 0
    %170 = vmatprep.subr.bf16.mxu0 0
    %171 = vmatpush1.bf16.msra.mxu0 0
    %172 = vmatprep.subr.bf16.mxu0 0
    %173 = vmatpush1.bf16.msra.mxu0 0
    %174 = vmatprep.subr.bf16.mxu0 0
    %175 = vmatpush1.bf16.msra.mxu0 0
    %176 = vmatprep.subr.bf16.mxu0 0
    %177 = vmatpush1.bf16.msra.mxu0 0
    %178 = vmatprep.subr.bf16.mxu0 0
    %179 = vmatpush1.bf16.msra.mxu0 0
    %180 = vmatprep.subr.bf16.mxu0 0
    %181 = vmatpush1.bf16.msra.mxu0 0
    %182 = vmatprep.subr.bf16.mxu0 0
    %183 = vmatpush1.bf16.msra.mxu0 0
    %184 = vmatprep.subr.bf16.mxu0 0
    %185 = vmatpush1.bf16.msra.mxu0 0
    %186 = vmatprep.subr.bf16.mxu0 0
    %187 = vmatpush1.bf16.msra.mxu0 0
    %188 = vmatprep.subr.bf16.mxu0 0
    %189 = vmatpush1.bf16.msra.mxu0 0
    %190 = vmatprep.mubr.bf16.mxu0 0
    %191 = vmatmul.mubr.bf16.gmra.mrb[0].mxu0 %v156
    %v192 = vpop.f32.mrb[0].mxu0
    %v193 = vadd.f32 %v141, %v192
    %v194 = vpop.f32.mrb[0].mxu0
    %v195 = vpop.f32.mrb[0].mxu0
    %v196 = vpop.f32.mrb[0].mxu0
    %197 = vdwg.mxu0
    %198 = vst [vmem:[#allocation8] sm:$0xff] %v193
    // Predicated region
    $region34: #{tpu_custom_call.1} parent=1 // pred_check
      _
    $region35: #{tpu_custom_call.1} parent=1 // pred_check_branch
      %200 = sbr.rel (0) target = $region37
    $region36: #{tpu_custom_call.1} parent=1 // pred_region
      %s202 = ssub.s32 128, 128
      %203 = vsyncadd [#allocation4], %s202
      %s205 = sshll.u32 [#allocation8], 4
      %s206 = int_to_ptr.vmem [resolvable:$true] %s205
      %208 = dma.vmem_to_hbm [thread:$0]  %s206, 128, %s5, [#allocation4]
    $region37: #{tpu_custom_call.1} parent=1 // pred_fallthru
      _
    // Predicated region
    $region38: #{tpu_custom_call.1} parent=1 // pred_check
      _
    $region39: #{tpu_custom_call.1} parent=1 // pred_check_branch
      %210 = sbr.rel (0) target = $region41
    $region40: #{tpu_custom_call.1} parent=1 // pred_region
      %211 = dma.done [#allocation4], 128
    $region41: #{tpu_custom_call.1} parent=1 // pred_fallthru
      _
    %212 = vsyncpa [#allocation3], 1
    %213 = vsyncpa [#allocation6], 1
    %214 = vsyncpa [#allocation4], 1

// kernel: tpu_custom_call.1
$region0: #{tpu_custom_call.1}
  #allocation0 [shape = 'u32[]', space=smem, size = 0x4, offset = 0x4, fixed_abs, tag = 'smem constant byte address 0x4 - core index']
  #allocation1 [shape = 'u32[144,128]{1,0:T(1,128)}', space=vmem, size = 0x12000, scoped, tag = 'internal scratch']
  %s0 = inlined_call_operand.hbm [shape: f32[8,32], index: 0, kind: input, shape index: {}]
  %s1 = inlined_call_operand.hbm [shape: bf16[32,32], index: 1, kind: input, shape index: {}]
  %s2 = inlined_call_operand.vmem [shape: f32[1,32], index: 2, kind: input, shape index: {}]
  %s3 = inlined_call_operand.hbm [shape: bf16[32,128], index: 3, kind: input, shape index: {}]
  %s4 = inlined_call_operand.vmem [shape: f32[1,128], index: 4, kind: input, shape index: {}]
  %s5 = inlined_call_operand.hbm [shape: f32[8,128], index: 5, kind: output, shape index: {}]
  %s6 = sld [smem:[#allocation0]]
  $region42: #{tpu_custom_call.1} parent=0
    _
  %s8 = ssub.s32 1, %s6
  %s9 = scalar_select 0, %s8, %s6
  $region1: #{tpu_custom_call.1} parent=0
    #allocation2 [shape = 'u8[4096]{0}', space=vmem, size = 0x1000, scoped, tag = 'input window, operand 0, single buffered']
    #allocation3 [shape = 's32[1]{0}', space=sflag, size = 0x4, scoped, tag = 'scoped memory for tpu_custom_call.1']
    #allocation4 [shape = 's32[1]{0}', space=sflag, size = 0x4, scoped, tag = 'scoped memory for tpu_custom_call.1']
    #allocation5 [shape = 'u8[8192]{0}', space=vmem, size = 0x2000, scoped, tag = 'input window, operand 1, single buffered']
    #allocation6 [shape = 's32[1]{0}', space=sflag, size = 0x4, scoped, tag = 'scoped memory for tpu_custom_call.1']
    #allocation7 [shape = 'u8[8192]{0}', space=vmem, size = 0x2000, scoped, tag = 'input window, operand 3, single buffered']
    #allocation8 [shape = 'u8[4096]{0}', space=vmem, size = 0x1000, scoped, tag = 'output window, operand 0, single buffered']
    %10 = vsyncpa [#allocation3], 0
    %11 = vsyncpa [#allocation6], 0
    %12 = vsyncpa [#allocation4], 0
    // Predicated region
    $region2: #{tpu_custom_call.1} parent=1 // pred_check
      _
    $region3: #{tpu_custom_call.1} parent=1 // pred_check_branch
      %14 = sbr.rel (0) target = $region5
    $region4: #{tpu_custom_call.1} parent=1 // pred_region
      %s16 = ssub.s32 128, 128
      %17 = vsyncadd [#allocation3], %s16
      %s19 = sshll.u32 [#allocation2], 4
      %s20 = int_to_ptr.vmem [resolvable:$true] %s19
      %22 = dma.hbm_to_vmem [thread:$0]  %s0, 128, %s20, [#allocation3]
    $region5: #{tpu_custom_call.1} parent=1 // pred_fallthru
      _
    // Predicated region
    $region6: #{tpu_custom_call.1} parent=1 // pred_check
      _
    $region7: #{tpu_custom_call.1} parent=1 // pred_check_branch
      %24 = sbr.rel (0) target = $region9
    $region8: #{tpu_custom_call.1} parent=1 // pred_region
      %s26 = ssub.s32 256, 256
      %27 = vsyncadd [#allocation6], %s26
      %s28 = sshll.u32 [#allocation5], 4
      %s29 = int_to_ptr.vmem [resolvable:$true] %s28
      %34 = dma.hbm_to_vmem [thread:$0]  %s1, 256, %s29, [#allocation6], 64, 64, 4
    $region9: #{tpu_custom_call.1} parent=1 // pred_fallthru
      _
    // Predicated region
    $region10: #{tpu_custom_call.1} parent=1 // pred_check
      _
    $region11: #{tpu_custom_call.1} parent=1 // pred_check_branch
      %36 = sbr.rel (0) target = $region13
    $region12: #{tpu_custom_call.1} parent=1 // pred_region
      _
    $region13: #{tpu_custom_call.1} parent=1 // pred_fallthru
      _
    // Predicated region
    $region14: #{tpu_custom_call.1} parent=1 // pred_check
      _
    $region15: #{tpu_custom_call.1} parent=1 // pred_check_branch
      %38 = sbr.rel (0) target = $region17
    $region16: #{tpu_custom_call.1} parent=1 // pred_region
      %s40 = ssub.s32 256, 256
      %41 = vsyncadd [#allocation6], %s40
      %s42 = sshll.u32 [#allocation7], 4
      %s43 = int_to_ptr.vmem [resolvable:$true] %s42
      %48 = dma.hbm_to_vmem [thread:$0]  %s3, 256, %s43, [#allocation6], 64, 64, 4
    $region17: #{tpu_custom_call.1} parent=1 // pred_fallthru
      _
    // Predicated region
    $region18: #{tpu_custom_call.1} parent=1 // pred_check
      _
    $region19: #{tpu_custom_call.1} parent=1 // pred_check_branch
      %50 = sbr.rel (0) target = $region21
    $region20: #{tpu_custom_call.1} parent=1 // pred_region
      _
    $region21: #{tpu_custom_call.1} parent=1 // pred_fallthru
      _
    // Predicated region
    $region22: #{tpu_custom_call.1} parent=1 // pred_check
      _
    $region23: #{tpu_custom_call.1} parent=1 // pred_check_branch
      %52 = sbr.rel (0) target = $region25
    $region24: #{tpu_custom_call.1} parent=1 // pred_region
      %53 = dma.done [#allocation3], 128
    $region25: #{tpu_custom_call.1} parent=1 // pred_fallthru
      _
    // Predicated region
    $region26: #{tpu_custom_call.1} parent=1 // pred_check
      _
    $region27: #{tpu_custom_call.1} parent=1 // pred_check_branch
      %55 = sbr.rel (0) target = $region29
    $region28: #{tpu_custom_call.1} parent=1 // pred_region
      %56 = dma.done [#allocation6], 256
    $region29: #{tpu_custom_call.1} parent=1 // pred_fallthru
      _
    // Predicated region
    $region30: #{tpu_custom_call.1} parent=1 // pred_check
      _
    $region31: #{tpu_custom_call.1} parent=1 // pred_check_branch
      %58 = sbr.rel (0) target = $region33
    $region32: #{tpu_custom_call.1} parent=1 // pred_region
      %59 = dma.done [#allocation6], 256
    $region33: #{tpu_custom_call.1} parent=1 // pred_fallthru
      _
    %v61 = vld [vmem:[#allocation2] sm:$0xff]
    %v62 = vpack.c.bf16 %v61, %v61
    %v63 = vld [vmem:[#allocation5] sm:$0xf]
    %v64 = vld [vmem:[#allocation5 + $0x4] sm:$0xf]
    %v65 = vld [vmem:[#allocation5 + $0x8] sm:$0xf]
    %v66 = vld [vmem:[#allocation5 + $0xc] sm:$0xf]
    %v67 = vld [vmem:[%s2] sm:$0x1]
    %v69 = vlaneseq
    %v70 = vshrl.u32 %v69, 7
    %v71 = vsub.s32 0, %v70
    %v72 = vrot.slane %v67, %v71
    %v78 = vunpack.c.l.b16 %v63
    %v79 = vunpack.c.l.b16 %v64
    %v80 = vunpack.c.l.b16 %v65
    %v81 = vunpack.c.l.b16 %v66
    %v82 = vpack.c.b16 %v79, %v78
    %v83 = vpack.c.b16 %v81, %v80
    %vm86 = vcmask 261120
    %v88 = vsel %vm86, %v62, 0
    %90 = vmatprep.subr.bf16.mxu0 0
    %91 = vmatpush1.bf16.msra.mxu0 %v82
    %92 = vmatprep.subr.bf16.mxu0 0
    %93 = vmatpush1.bf16.msra.mxu0 %v83
    %94 = vmatprep.subr.bf16.mxu0 0
    %95 = vmatpush1.bf16.msra.mxu0 0
    %96 = vmatprep.subr.bf16.mxu0 0
    %97 = vmatpush1.bf16.msra.mxu0 0
    %98 = vmatprep.subr.bf16.mxu0 0
    %99 = vmatpush1.bf16.msra.mxu0 0
    %100 = vmatprep.subr.bf16.mxu0 0
    %101 = vmatpush1.bf16.msra.mxu0 0
    %102 = vmatprep.subr.bf16.mxu0 0
    %103 = vmatpush1.bf16.msra.mxu0 0
    %104 = vmatprep.subr.bf16.mxu0 0
    %105 = vmatpush1.bf16.msra.mxu0 0
    %106 = vmatprep.subr.bf16.mxu0 0
    %107 = vmatpush1.bf16.msra.mxu0 0
    %108 = vmatprep.subr.bf16.mxu0 0
    %109 = vmatpush1.bf16.msra.mxu0 0
    %110 = vmatprep.subr.bf16.mxu0 0
    %111 = vmatpush1.bf16.msra.mxu0 0
    %112 = vmatprep.subr.bf16.mxu0 0
    %113 = vmatpush1.bf16.msra.mxu0 0
    %114 = vmatprep.subr.bf16.mxu0 0
    %115 = vmatpush1.bf16.msra.mxu0 0
    %116 = vmatprep.subr.bf16.mxu0 0
    %117 = vmatpush1.bf16.msra.mxu0 0
    %118 = vmatprep.subr.bf16.mxu0 0
    %119 = vmatpush1.bf16.msra.mxu0 0
    %120 = vmatprep.subr.bf16.mxu0 0
    %121 = vmatpush1.bf16.msra.mxu0 0
    %122 = vmatprep.mubr.bf16.mxu0 0
    %123 = vmatmul.mubr.bf16.gmra.mrb[0].mxu0 %v88
    %v124 = vpop.f32.mrb[0].mxu0
    %v125 = vadd.f32 %v72, %v124
    %v126 = vpop.f32.mrb[0].mxu0
    %v127 = vpop.f32.mrb[0].mxu0
    %v128 = vpop.f32.mrb[0].mxu0
    %129 = vdwg.mxu0
    %v130 = vmax.f32 %v125, 0.0
    %v131 = vpack.c.bf16 %v130, %v130
    %v132 = vld [vmem:[#allocation7] sm:$0xf]
    %v133 = vld [vmem:[#allocation7 + $0x4] sm:$0xf]
    %v134 = vld [vmem:[#allocation7 + $0x8] sm:$0xf]
    %v135 = vld [vmem:[#allocation7 + $0xc] sm:$0xf]
    %v136 = vld [vmem:[%s4] sm:$0x1]
    %v138 = vlaneseq
    %v139 = vshrl.u32 %v138, 7
    %v140 = vsub.s32 0, %v139
    %v141 = vrot.slane %v136, %v140
    %v147 = vunpack.c.l.b16 %v132
    %v148 = vunpack.c.l.b16 %v133
    %v149 = vunpack.c.l.b16 %v134
    %v150 = vunpack.c.l.b16 %v135
    %v151 = vpack.c.b16 %v148, %v147
    %v152 = vpack.c.b16 %v150, %v149
    %v156 = vsel %vm86, %v131, 0
    %158 = vmatprep.subr.bf16.mxu0 0
    %159 = vmatpush1.bf16.msra.mxu0 %v151
    %160 = vmatprep.subr.bf16.mxu0 0
    %161 = vmatpush1.bf16.msra.mxu0 %v152
    %162 = vmatprep.subr.bf16.mxu0 0
    %163 = vmatpush1.bf16.msra.mxu0 0
    %164 = vmatprep.subr.bf16.mxu0 0
    %165 = vmatpush1.bf16.msra.mxu0 0
    %166 = vmatprep.subr.bf16.mxu0 0
    %167 = vmatpush1.bf16.msra.mxu0 0
    %168 = vmatprep.subr.bf16.mxu0 0
    %169 = vmatpush1.bf16.msra.mxu0 0
    %170 = vmatprep.subr.bf16.mxu0 0
    %171 = vmatpush1.bf16.msra.mxu0 0
    %172 = vmatprep.subr.bf16.mxu0 0
    %173 = vmatpush1.bf16.msra.mxu0 0
    %174 = vmatprep.subr.bf16.mxu0 0
    %175 = vmatpush1.bf16.msra.mxu0 0
    %176 = vmatprep.subr.bf16.mxu0 0
    %177 = vmatpush1.bf16.msra.mxu0 0
    %178 = vmatprep.subr.bf16.mxu0 0
    %179 = vmatpush1.bf16.msra.mxu0 0
    %180 = vmatprep.subr.bf16.mxu0 0
    %181 = vmatpush1.bf16.msra.mxu0 0
    %182 = vmatprep.subr.bf16.mxu0 0
    %183 = vmatpush1.bf16.msra.mxu0 0
    %184 = vmatprep.subr.bf16.mxu0 0
    %185 = vmatpush1.bf16.msra.mxu0 0
    %186 = vmatprep.subr.bf16.mxu0 0
    %187 = vmatpush1.bf16.msra.mxu0 0
    %188 = vmatprep.subr.bf16.mxu0 0
    %189 = vmatpush1.bf16.msra.mxu0 0
    %190 = vmatprep.mubr.bf16.mxu0 0
    %191 = vmatmul.mubr.bf16.gmra.mrb[0].mxu0 %v156
    %v192 = vpop.f32.mrb[0].mxu0
    %v193 = vadd.f32 %v141, %v192
    %v194 = vpop.f32.mrb[0].mxu0
    %v195 = vpop.f32.mrb[0].mxu0
    %v196 = vpop.f32.mrb[0].mxu0
    %197 = vdwg.mxu0
    %198 = vst [vmem:[#allocation8] sm:$0xff] %v193
    // Predicated region
    $region34: #{tpu_custom_call.1} parent=1 // pred_check
      _
    $region35: #{tpu_custom_call.1} parent=1 // pred_check_branch
      %200 = sbr.rel (0) target = $region37
    $region36: #{tpu_custom_call.1} parent=1 // pred_region
      %s202 = ssub.s32 128, 128
      %203 = vsyncadd [#allocation4], %s202
      %s205 = sshll.u32 [#allocation8], 4
      %s206 = int_to_ptr.vmem [resolvable:$true] %s205
      %208 = dma.vmem_to_hbm [thread:$0]  %s206, 128, %s5, [#allocation4]
    $region37: #{tpu_custom_call.1} parent=1 // pred_fallthru
      _
    // Predicated region
    $region38: #{tpu_custom_call.1} parent=1 // pred_check
      _
    $region39: #{tpu_custom_call.1} parent=1 // pred_check_branch
      %210 = sbr.rel (0) target = $region41
    $region40: #{tpu_custom_call.1} parent=1 // pred_region
      %211 = dma.done [#allocation4], 128
    $region41: #{tpu_custom_call.1} parent=1 // pred_fallthru
      _
    %212 = vsyncpa [#allocation3], 1
    %213 = vsyncpa [#allocation6], 1
    %214 = vsyncpa [#allocation4], 1

</llo_original>
